<compile_context>
chip_gen: v7x
topology: tpu7x:2x2x1
jax: 0.10.0
libtpu: 0.0.40
codegen_flags: <defaults>
</compile_context>

<pallas_src>
import functools
import math

import numpy as np
import jax
import jax.numpy as jnp
from jax import lax
from jax.experimental import pallas as pl
from jax.experimental.pallas import tpu as pltpu

QUAN_WIDTH = 16
BN_EPS = 1e-5
NEG_INF = float("-inf")


def _round_up(x, m):
    return ((x + m - 1) // m) * m


def _pick_tn(Np):
    # wider N tiles feed the 256-wide MXU on v6e/v7x; 128 keeps lane density
    return 256 if Np % 256 == 0 else 128


def _pick_tq_rows(Wp, Ho, tn):
    """Row tile as a multiple of the flat row stride Wp so the column-validity
    pattern is tile invariant (single resident mask block, no per-tile DMA)."""
    target = 256 if tn == 256 else 512
    return Wp * max(1, min(target // Wp, max(Ho, 1)))


def _pick_tq_flat(q_target, tn):
    target = 256 if tn == 256 else 512
    return _round_up(max(1, min(target, q_target)), 8)


@functools.lru_cache(maxsize=None)
def _vmem_cap_bytes():
    # generation-aware VMEM budget (v7x: 64 MiB/TC, v5e/v6e: 128 MiB)
    cap = 128 * 2 ** 20
    try:
        cap = int(getattr(pltpu.get_tpu_info(), "vmem_capacity_bytes", cap))
    except Exception:
        pass
    return int(cap * 0.55)


def _vmem_limit(est_bytes):
    return int(min(_vmem_cap_bytes(),
                   max(16 * 2 ** 20, 2 * int(est_bytes) + (4 << 20))))


def _colmask(tq, Wp, Wo, margin):
    """Tile-invariant column-validity mask, shape (tq, 1) f32."""
    if Wo >= Wp:
        cm = np.ones((tq,), np.float32)
    else:
        cm = (((np.arange(tq) - margin) % Wp) < Wo).astype(np.float32)
    return jnp.asarray(cm.reshape(tq, 1))


def _scale_pair(amax, width):
    n_levels = float(2 ** (width - 1) - 1)
    scale = jnp.where(amax > 0.0, amax / n_levels, 1.0).astype(jnp.float32)
    inv = (1.0 / scale).astype(jnp.float32)
    return jnp.stack([scale, inv]).reshape(1, 2)


# ----------------------------------------------------------------------------
# Fused conv kernel:
#   out = mask * act(sum_taps bf16(x[q0+off]) @ W_tap + bias [+ residual])
# with a per-(j, n) abs-max accumulated across the row-tile axis.
# ----------------------------------------------------------------------------
def _conv_kernel_factory(taps, tq, tn, lo, hi, relu, res_mode, res_shift,
                         x_tiled):
    def kernel(*refs):
        if res_mode is None:
            x_ref, w_ref, b_ref, cm_ref, o_ref, pmax_ref = refs
            r_ref = None
        else:
            x_ref, w_ref, b_ref, cm_ref, r_ref, o_ref, pmax_ref = refs
        i = pl.program_id(2)
        q0 = pl.multiple_of(i * tq, tq)

        acc = jnp.zeros((tq, tn), jnp.float32)
        if x_tiled:
            acc = acc + jnp.dot(x_ref[0].astype(jnp.bfloat16), w_ref[0],
                                preferred_element_type=jnp.float32)
        else:
            for t, (ph, off) in enumerate(taps):
                a = x_ref[ph, pl.ds(q0 + off, tq), :].astype(jnp.bfloat16)
                acc = acc + jnp.dot(a, w_ref[t],
                                    preferred_element_type=jnp.float32)

        acc = acc + b_ref[...]
        if res_mode == "blocked":
            acc = acc + r_ref[...].astype(jnp.float32)
        elif res_mode == "resident":
            acc = acc + r_ref[pl.ds(q0 + res_shift, tq), :].astype(jnp.float32)
        if relu:
            acc = jnp.maximum(acc, 0.0)

        # Row/column validity from compile-time geometry; invalid positions are
        # written as exact zeros so this output can feed the next 3x3 conv
        # directly (its spatial padding) and so the abs-max needs no extra mask.
        # Padded output channels are exactly zero (zero weight/bias/residual
        # padding), so no column-range mask is required.
        ridx = q0 + lax.broadcasted_iota(jnp.int32, (tq, tn), 0)
        ok = ridx < hi
        if lo > 0:
            ok = jnp.logical_and(ok, ridx >= lo)
        ok = jnp.logical_and(ok, cm_ref[...] > 0.5)
        out = jnp.where(ok, acc, 0.0)
        o_ref[...] = out

        @pl.when(i == 0)
        def _():
            pmax_ref[...] = jnp.zeros_like(pmax_ref)
        pmax_ref[...] = jnp.maximum(pmax_ref[...], jnp.max(jnp.abs(out)))
    return kernel


@functools.lru_cache(maxsize=None)
def _build_conv(N, nph, QF, K, taps, Qp, tq, Np, tn, lo, hi,
                relu, res_mode, res_shift, res_rows, x_tiled):
    nI = Qp // tq
    nJ = Np // tn
    T = len(taps)

    if x_tiled:
        x_spec = pl.BlockSpec((None, 1, tq, K), lambda j, n, i: (n, 0, i, 0))
        x_bytes = tq * _round_up(K, 128) * 4
    else:
        x_spec = pl.BlockSpec((None, nph, QF, K), lambda j, n, i: (n, 0, 0, 0))
        x_bytes = nph * _round_up(QF, 8) * _round_up(K, 128) * 4

    in_specs = [
        x_spec,
        pl.BlockSpec((T, K, tn), lambda j, n, i: (0, 0, j)),     # bf16 weights
        pl.BlockSpec((1, tn), lambda j, n, i: (0, j)),           # bias
        pl.BlockSpec((tq, 1), lambda j, n, i: (0, 0)),           # column mask
    ]
    res_bytes = 0
    if res_mode == "blocked":
        in_specs.append(pl.BlockSpec((None, tq, tn), lambda j, n, i: (n, i, j)))
        res_bytes = tq * tn * 4
    elif res_mode == "resident":
        in_specs.append(
            pl.BlockSpec((None, res_rows, tn), lambda j, n, i: (n, 0, j)))
        res_bytes = _round_up(res_rows, 8) * tn * 4

    out_specs = (
        pl.BlockSpec((None, tq, tn), lambda j, n, i: (n, i, j)),
        pl.BlockSpec((8, 128), lambda j, n, i: (j * N + n, 0)),
    )
    out_shape = (
        jax.ShapeDtypeStruct((N, Qp, Np), jnp.float32),
        jax.ShapeDtypeStruct((nJ * N * 8, 128), jnp.float32),
    )

    est = (2 * (x_bytes + T * _round_up(K, 128) * tn * 2 + 8 * tn * 4
                + tq * 128 * 4 + res_bytes + tq * tn * 4 + 4096)
           + 2 * tq * tn * 4)

    return pl.pallas_call(
        _conv_kernel_factory(taps, tq, tn, lo, hi, relu, res_mode, res_shift,
                             x_tiled),
        out_shape=out_shape,
        grid=(nJ, N, nI),   # weights resident across batch; row-tiles innermost
        in_specs=in_specs,
        out_specs=out_specs,
        compiler_params=pltpu.CompilerParams(
            dimension_semantics=("parallel", "parallel", "arbitrary"),
            vmem_limit_bytes=_vmem_limit(est)),
    )


def _conv_pallas(x_in, w_oihw, bias, *, stride, padding, relu,
                 out_margin=0, min_out_rows=0, residual=None,
                 return_built=False):
    """Conv + bias (+residual) + optional ReLU producing a flat padded layout.

    x_in: ("nhwc", arr) or ("flat", arr, (Ho, Wo, Wp, margin_in)) where the
    flat form is a previous conv's (zero-masked, quantized) output consumed
    directly (no extract / re-pad pass).
    residual: None | ("blocked", nhwc) | ("resident", flat_arr, row_shift).
    Returns (out_flat (N, Qp, Np), amax, geom=(Ho, Wo, Wp, O, margin), tq
             [, built_flat_input])."""
    O, CinW, kh, kw = w_oihw.shape
    Np = _round_up(O, 128)
    tn = _pick_tn(Np)
    w_taps = jnp.transpose(w_oihw, (2, 3, 1, 0)).reshape(kh * kw, CinW, O)
    built_x = None

    if x_in[0] == "flat":
        arr, (Hi, Wi, Wp, m_in) = x_in[1], x_in[2]
        assert stride == 1 and kh == 3 and kw == 3 and padding == 1
        assert m_in >= Wp + 1
        N, R_in, K = arr.shape
        Ho, Wo = Hi, Wi
        margin = m_in - (Wp + 1)
        tq = _pick_tq_rows(Wp, Ho, tn)
        Qp = _round_up(max(margin + Ho * Wp, min_out_rows), tq)
        taps = tuple((0, dy * Wp + dx) for dy in range(3) for dx in range(3))
        max_off = max(off for _, off in taps)
        QF = max(R_in, Qp + max_off)
        if R_in < QF:
            arr = jnp.pad(arr, ((0, 0), (0, QF - R_in), (0, 0)))
        x_flat = arr.reshape(N, 1, QF, K)
        nph, x_tiled = 1, False
        w_k = w_taps if K == CinW else jnp.pad(
            w_taps, ((0, 0), (0, K - CinW), (0, 0)))
    else:
        x_nhwc = x_in[1]
        N, H, W, Cin = x_nhwc.shape
        assert Cin >= CinW
        if Cin > CinW:
            w_taps = jnp.pad(w_taps, ((0, 0), (0, Cin - CinW), (0, 0)))
        Ho = (H + 2 * padding - kh) // stride + 1
        Wo = (W + 2 * padding - kw) // stride + 1
        margin = out_margin

        if kh == 1 and kw == 1 and padding == 0:
            # 1x1 (optionally strided) conv: plain GEMM over output pixels.
            assert margin == 0
            xs = x_nhwc[:, ::stride, ::stride, :]
            Wp = Wo
            q_target = Ho * Wo
            tq = _pick_tq_flat(q_target, tn)
            Qp = _round_up(max(q_target, min_out_rows), tq)
            x_flat = jnp.pad(xs.reshape(N, 1, q_target, Cin),
                             ((0, 0), (0, 0), (0, Qp - q_target), (0, 0)))
            taps = ((0, 0),)
            K, w_k, nph, x_tiled, QF = Cin, w_taps, 1, True, Qp
        elif Cin < 16:
            # lane-sparse stem (7x7, Cin=3): JAX-side im2col -> one GEMM.
            assert margin == 0
            xp = jnp.pad(x_nhwc, ((0, 0), (padding, padding),
                                  (padding, padding), (0, 0)))
            cols = [xp[:, dy:dy + stride * (Ho - 1) + 1:stride,
                       dx:dx + stride * (Wo - 1) + 1:stride, :]
                    for dy in range(kh) for dx in range(kw)]
            a = jnp.stack(cols, axis=3).reshape(N, Ho * Wo, kh * kw * Cin)
            Wp = Wo
            q_target = Ho * Wo
            tq = _pick_tq_flat(q_target, tn)
            Qp = _round_up(max(q_target, min_out_rows), tq)
            a = jnp.pad(a, ((0, 0), (0, Qp - q_target), (0, 0)))
            x_flat = a.reshape(N, 1, Qp, kh * kw * Cin)
            taps = ((0, 0),)
            K = kh * kw * Cin
            w_k = w_taps.reshape(1, K, O)
            nph, x_tiled, QF = 1, True, Qp
        elif stride == 1:
            # resident-image 3x3/stride-1 path; output carries `margin` rows.
            Wp = _round_up(W + 2 * padding, 8)          # 8-aligned row stride
            xp = jnp.pad(x_nhwc, ((0, 0), (padding, padding),
                                  (padding, Wp - W - padding), (0, 0)))
            Hp = H + 2 * padding
            tq = _pick_tq_rows(Wp, Ho, tn)
            Qp = _round_up(max(margin + Ho * Wp, min_out_rows), tq)
            taps = tuple((0, dy * Wp + dx)
                         for dy in range(kh) for dx in range(kw))
            max_off = max(off for _, off in taps)
            QF = max(margin + Hp * Wp, Qp + max_off)
            flat = jnp.pad(xp.reshape(N, Hp * Wp, Cin),
                           ((0, 0), (margin, QF - margin - Hp * Wp), (0, 0)))
            built_x = flat
            x_flat = flat.reshape(N, 1, QF, Cin)
            K, w_k, nph, x_tiled = Cin, w_taps, 1, False
        else:
            # stride-2 3x3: phase (space-to-depth) layout, contiguous taps.
            assert stride == 2
            xp = jnp.pad(x_nhwc, ((0, 0), (padding, padding),
                                  (padding, padding), (0, 0)))
            Hp, Wpf = H + 2 * padding, W + 2 * padding
            H2 = -(-Hp // 2)
            W2 = _round_up(-(-Wpf // 2), 8)
            xe = jnp.pad(xp, ((0, 0), (0, 2 * H2 - Hp),
                              (0, 2 * W2 - Wpf), (0, 0)))
            xr = jnp.transpose(xe.reshape(N, H2, 2, W2, 2, Cin),
                               (0, 2, 4, 1, 3, 5)).reshape(N, 4, H2 * W2, Cin)
            Wp = W2
            tq = _pick_tq_rows(Wp, Ho, tn)
            Qp = _round_up(max(margin + Ho * Wp, min_out_rows), tq)
            taps = tuple(((dy % 2) * 2 + (dx % 2), (dy // 2) * Wp + dx // 2)
                         for dy in range(kh) for dx in range(kw))
            max_off = max(off for _, off in taps)
            QF = max(margin + H2 * Wp, Qp + max_off)
            x_flat = jnp.pad(xr, ((0, 0), (0, 0),
                                  (margin, QF - margin - H2 * Wp), (0, 0)))
            K, w_k, nph, x_tiled = Cin, w_taps, 4, False

    lo = margin
    hi = margin + Ho * Wp
    cm = _colmask(tq, Wp, Wo, margin)
    b_pad = jnp.pad(bias.reshape(1, O),
                    ((0, 0), (0, Np - O))).astype(jnp.float32)
    w_pad = jnp.pad(w_k, ((0, 0), (0, 0), (0, Np - O))).astype(jnp.bfloat16)

    res_mode, res_shift, res_rows = None, 0, 0
    args = [x_flat.astype(jnp.float32), w_pad, b_pad, cm]
    if residual is not None:
        if residual[0] == "blocked":
            r = residual[1]
            assert r.shape == (N, Ho, Wo, O)
            r = jnp.pad(r, ((0, 0), (0, 0), (0, Wp - Wo), (0, Np - O)))
            r = r.reshape(N, Ho * Wp, Np)
            r = jnp.pad(r, ((0, 0), (margin, Qp - margin - Ho * Wp), (0, 0)))
            args.append(r.astype(jnp.float32))
            res_mode = "blocked"
        else:
            _, r_flat, res_shift = residual
            assert r_flat.shape[0] == N and r_flat.shape[2] == Np
            need = Qp + res_shift
            if r_flat.shape[1] < need:
                r_flat = jnp.pad(r_flat,
                                 ((0, 0), (0, need - r_flat.shape[1]), (0, 0)))
            res_rows = r_flat.shape[1]
            args.append(r_flat.astype(jnp.float32))
            res_mode = "resident"

    call = _build_conv(N, nph, QF, K, taps, Qp, tq, Np, tn, lo, hi,
                       bool(relu), res_mode, res_shift, res_rows, x_tiled)
    out_flat, pmax = call(*args)
    amax = jnp.max(pmax)
    geom = (Ho, Wo, Wp, O, margin)
    if return_built:
        return out_flat, amax, geom, tq, built_x
    return out_flat, amax, geom, tq


def _extract_nhwc(out_flat, geom):
    Ho, Wo, Wp, O, margin = geom
    N = out_flat.shape[0]
    v = out_flat[:, margin:margin + Ho * Wp, :O].reshape(N, Ho, Wp, O)
    return v[:, :, :Wo, :]


# ----------------------------------------------------------------------------
# Fake quantization: quantize pass (scale / 1/scale hoisted), standalone absmax
# ----------------------------------------------------------------------------
@functools.lru_cache(maxsize=None)
def _build_quant(R, C, tr, width):
    n_levels = float(2 ** (width - 1) - 1)

    def kernel(x_ref, s_ref, o_ref):
        q = jnp.clip(jnp.round(x_ref[...] * s_ref[0, 1]), -n_levels, n_levels)
        o_ref[...] = q * s_ref[0, 0]

    return pl.pallas_call(
        kernel,
        out_shape=jax.ShapeDtypeStruct((R, C), jnp.float32),
        grid=(R // tr,),
        in_specs=[pl.BlockSpec((tr, C), lambda i: (i, 0)),
                  pl.BlockSpec(memory_space=pltpu.MemorySpace.SMEM)],
        out_specs=pl.BlockSpec((tr, C), lambda i: (i, 0)),
        compiler_params=pltpu.CompilerParams(
            dimension_semantics=("parallel",),
            vmem_limit_bytes=_vmem_limit(4 * tr * _round_up(C, 128) * 4)),
    )


def _absmax_kernel(x_ref, o_ref):
    @pl.when(pl.program_id(0) == 0)
    def _():
        o_ref[...] = jnp.zeros_like(o_ref)
    o_ref[...] = jnp.maximum(o_ref[...], jnp.max(jnp.abs(x_ref[...])))


@functools.lru_cache(maxsize=None)
def _build_absmax(R, C, tr):
    return pl.pallas_call(
        _absmax_kernel,
        out_shape=jax.ShapeDtypeStruct((1, 1), jnp.float32),
        grid=(R // tr,),
        in_specs=[pl.BlockSpec((tr, C), lambda i: (i, 0))],
        out_specs=pl.BlockSpec((1, 1), lambda i: (0, 0)),
        compiler_params=pltpu.CompilerParams(
            dimension_semantics=("arbitrary",),
            vmem_limit_bytes=_vmem_limit(2 * tr * _round_up(C, 128) * 4)),
    )


def _quantize_flat_out(out_flat, amax, width, tr):
    N, Qp, C = out_flat.shape
    x2d = out_flat.reshape(N * Qp, C)
    sp = _scale_pair(amax, width)
    q = _build_quant(N * Qp, C, tr, width)(x2d, sp)
    return q.reshape(N, Qp, C)


def fake_quantize(x, width=QUAN_WIDTH):
    """Standalone per-tensor symmetric fake quantization (inputs / weights)."""
    shape = x.shape
    flat = x.reshape(-1).astype(jnp.float32)
    size = int(flat.shape[0])
    cols = 512 if size >= 512 * 8 else 128
    rows = -(-size // cols)
    tr = min(1024, _round_up(rows, 8))
    Rp = _round_up(rows, tr)
    padded = jnp.pad(flat, (0, Rp * cols - size)).reshape(Rp, cols)
    amax = _build_absmax(Rp, cols, tr)(padded)[0, 0]
    sp = _scale_pair(amax, width)
    q = _build_quant(Rp, cols, tr, width)(padded, sp)
    return q.reshape(-1)[:size].reshape(shape)


# ----------------------------------------------------------------------------
# MaxPool 3x3, stride 2, padding 1 (phase-flattened, fused abs-max, in-kernel
# validity mask so -inf padding never leaks into the quantizer)
# ----------------------------------------------------------------------------
def _pool_kernel_factory(taps, tq, C, hi):
    def kernel(x_ref, cm_ref, o_ref, pmax_ref):
        i = pl.program_id(1)
        q0 = pl.multiple_of(i * tq, tq)
        acc = jnp.full((tq, C), NEG_INF, jnp.float32)
        for ph, off in taps:
            acc = jnp.maximum(acc, x_ref[ph, pl.ds(q0 + off, tq), :])
        ridx = q0 + lax.broadcasted_iota(jnp.int32, (tq, C), 0)
        ok = jnp.logical_and(ridx < hi, cm_ref[...] > 0.5)
        out = jnp.where(ok, acc, 0.0)
        o_ref[...] = out

        @pl.when(i == 0)
        def _():
            pmax_ref[...] = jnp.zeros_like(pmax_ref)
        pmax_ref[...] = jnp.maximum(pmax_ref[...], jnp.max(jnp.abs(out)))
    return kernel


@functools.lru_cache(maxsize=None)
def _build_pool(N, nph, QF, C, taps, Qp, tq, hi):
    nI = Qp // tq
    est = 2 * (nph * _round_up(QF, 8) * _round_up(C, 128) * 4
               + 2 * tq * _round_up(C, 128) * 4 + tq * 128 * 4 + 4096)
    return pl.pallas_call(
        _pool_kernel_factory(taps, tq, C, hi),
        out_shape=(jax.ShapeDtypeStruct((N, Qp, C), jnp.float32),
                   jax.ShapeDtypeStruct((N * 8, 128), jnp.float32)),
        grid=(N, nI),
        in_specs=[pl.BlockSpec((None, nph, QF, C), lambda n, i: (n, 0, 0, 0)),
                  pl.BlockSpec((tq, 1), lambda n, i: (0, 0))],
        out_specs=(pl.BlockSpec((None, tq, C), lambda n, i: (n, i, 0)),
                   pl.BlockSpec((8, 128), lambda n, i: (n, 0))),
        compiler_params=pltpu.CompilerParams(
            dimension_semantics=("parallel", "arbitrary"),
            vmem_limit_bytes=_vmem_limit(est)),
    )


def maxpool_fq_3x3_s2_p1(x_nhwc, width=QUAN_WIDTH):
    """3x3/stride-2/pad-1 max pool fused with the following fake-quantize."""
    N, H, W, C = x_nhwc.shape
    xp = jnp.pad(x_nhwc, ((0, 0), (1, 1), (1, 1), (0, 0)),
                 constant_values=NEG_INF)
    Hp, Wpf = H + 2, W + 2
    Ho = (H - 1) // 2 + 1
    Wo = (W - 1) // 2 + 1
    H2 = -(-Hp // 2)
    W2 = _round_up(-(-Wpf // 2), 8)
    xe = jnp.pad(xp, ((0, 0), (0, 2 * H2 - Hp), (0, 2 * W2 - Wpf), (0, 0)),
                 constant_values=NEG_INF)
    xr = jnp.transpose(xe.reshape(N, H2, 2, W2, 2, C),
                       (0, 2, 4, 1, 3, 5)).reshape(N, 4, H2 * W2, C)
    taps = tuple(((dy % 2) * 2 + (dx % 2), (dy // 2) * W2 + dx // 2)
                 for dy in range(3) for dx in range(3))
    tq = _pick_tq_rows(W2, Ho, 128)
    Qp = _round_up(Ho * W2, tq)
    max_off = max(off for _, off in taps)
    QF = max(H2 * W2, Qp + max_off)
    x_flat = jnp.pad(xr, ((0, 0), (0, 0), (0, QF - H2 * W2), (0, 0)),
                     constant_values=NEG_INF)
    cm = _colmask(tq, W2, Wo, 0)

    out_flat, pmax = _build_pool(N, 4, QF, C, taps, Qp, tq, Ho * W2)(
        x_flat.astype(jnp.float32), cm)
    amax = jnp.max(pmax)
    qf = _quantize_flat_out(out_flat, amax, width, tr=tq)
    return qf[:, :Ho * W2, :].reshape(N, Ho, W2, C)[:, :, :Wo, :]


# ----------------------------------------------------------------------------
# Parameters (deterministic init matching the PyTorch __init__ distributions)
# ----------------------------------------------------------------------------
def _bn_params(C):
    return dict(gamma=jnp.ones((C,), jnp.float32),
                beta=jnp.zeros((C,), jnp.float32),
                mean=jnp.zeros((C,), jnp.float32),
                var=jnp.ones((C,), jnp.float32))


def init_params(key, layers=(1, 1, 1, 1)):
    def conv_w(k, O, I, kh, kw):
        n = kh * kw * O
        return (jax.random.normal(k, (O, I, kh, kw), jnp.float32)
                * math.sqrt(2.0 / n))

    keys = iter(jax.random.split(key, 256))
    params = {"conv1_w": conv_w(next(keys), 64, 3, 7, 7),
              "bn1": _bn_params(64)}

    inplanes = 64
    expansion = 1  # BasicBlock
    stage_planes = (64, 128, 256, 512)
    stage_strides = (1, 2, 2, 2)
    params["layers"] = []
    for planes, nblocks, stride in zip(stage_planes, layers, stage_strides):
        blocks = []
        for bi in range(nblocks):
            s = stride if bi == 0 else 1
            blk = {
                "conv1_w": conv_w(next(keys), planes, inplanes, 3, 3),
                "bn1": _bn_params(planes),
                "conv2_w": conv_w(next(keys), planes, planes, 3, 3),
                "bn2": _bn_params(planes),
                "stride": s,
            }
            if s != 1 or inplanes != planes * expansion:
                blk["down_w"] = conv_w(next(keys), planes * expansion,
                                       inplanes, 1, 1)
                blk["down_bn"] = _bn_params(planes * expansion)
            blocks.append(blk)
            inplanes = planes * expansion
        params["layers"].append(blocks)
    return params


def conv_bn_fold(w, bn):
    """ConvBNTrans: fold BatchNorm (running stats) into conv weight/bias."""
    scale = bn["gamma"] / jnp.sqrt(bn["var"] + BN_EPS)
    w_f = w * scale[:, None, None, None]
    b_f = bn["beta"] - bn["mean"] * scale
    return w_f, b_f


def prepare_params(params, width=QUAN_WIDTH):
    """Fold BN and fake-quantize weights/biases ONCE (hoisted out of forward)."""
    w1, b1 = conv_bn_fold(params["conv1_w"], params["bn1"])
    prep = {"conv1_w": fake_quantize(w1, width),
            "conv1_b": fake_quantize(b1, width),
            "layers": []}
    for stage in params["layers"]:
        blocks = []
        for blk in stage:
            w1, b1 = conv_bn_fold(blk["conv1_w"], blk["bn1"])
            w2, b2 = conv_bn_fold(blk["conv2_w"], blk["bn2"])
            nb = {"conv1_w": fake_quantize(w1, width),
                  "conv1_b": fake_quantize(b1, width),
                  "conv2_w": fake_quantize(w2, width),
                  "conv2_b": fake_quantize(b2, width),
                  "stride": blk["stride"]}
            if "down_w" in blk:
                wd, bd = conv_bn_fold(blk["down_w"], blk["down_bn"])
                nb["down_w"] = fake_quantize(wd, width)
                nb["down_b"] = fake_quantize(bd, width)
            blocks.append(nb)
        prep["layers"].append(blocks)
    return prep


# ----------------------------------------------------------------------------
# BasicBlock (conv1 and conv2 chained in the flat layout) + full forward
# ----------------------------------------------------------------------------
def basic_block(x, blk, width=QUAN_WIDTH):
    stride = blk["stride"]
    N, H, W, Cin = x.shape
    planes = blk["conv2_w"].shape[0]
    Np_out = _round_up(planes, 128)
    tn2 = _pick_tn(Np_out)
    identity = "down_w" not in blk

    # conv2 geometry (3x3 / stride-1 on the post-conv1 spatial dims)
    if stride == 1:
        Ho, Wo = H, W
        Wp = _round_up(W + 2, 8)
    else:
        Ho = (H + 2 - 3) // 2 + 1
        Wo = (W + 2 - 3) // 2 + 1
        Wp = _round_up(-(-(W + 2) // 2), 8)
    tq2 = _pick_tq_rows(Wp, Ho, tn2)
    Qp2 = _round_up(Ho * Wp, tq2)
    M1 = Wp + 1                 # conv1 output margin == conv2 spatial padding
    qf2 = Qp2 + 2 * Wp + 2      # rows conv2 needs from its (flat) input

    if stride == 1 and identity:
        # Pad channels so the built conv1 input buffer doubles as the resident
        # identity residual for conv2 (no separate residual re-pad pass).
        x_in = x if Np_out == Cin else jnp.pad(
            x, ((0, 0), (0, 0), (0, 0), (0, Np_out - Cin)))
        out1, amax1, geom1, tq1, built = _conv_pallas(
            ("nhwc", x_in), blk["conv1_w"], blk["conv1_b"],
            stride=1, padding=1, relu=True,
            out_margin=M1, min_out_rows=qf2, return_built=True)
        residual = ("resident", built, 2 * (Wp + 1))
    else:
        out1, amax1, geom1, tq1 = _conv_pallas(
            ("nhwc", x), blk["conv1_w"], blk["conv1_b"],
            stride=stride, padding=1, relu=True,
            out_margin=M1, min_out_rows=qf2)
        # TODO(synk): downsample amax is discarded and its output is not
        #   re-quantized before the add (matches the reconstruction).
        r_flat, _, r_geom, _ = _conv_pallas(
            ("nhwc", x), blk["down_w"], blk["down_b"],
            stride=stride, padding=0, relu=False)
        residual = ("blocked", _extract_nhwc(r_flat, r_geom))

    q1 = _quantize_flat_out(out1, amax1, width, tr=tq1)

    out2, amax2, geom2, tq2b = _conv_pallas(
        ("flat", q1, (geom1[0], geom1[1], geom1[2], geom1[4])),
        blk["conv2_w"], blk["conv2_b"],
        stride=1, padding=1, relu=True, residual=residual)
    q2 = _quantize_flat_out(out2, amax2, width, tr=tq2b)
    return _extract_nhwc(q2, geom2)


def resnet_forward(x_nchw, qparams, width=QUAN_WIDTH):
    x = jnp.transpose(x_nchw, (0, 2, 3, 1)).astype(jnp.float32)  # NCHW -> NHWC
    x = fake_quantize(x, width)

    # NOTE: the reference first computes self.conv1(x)/bn1 and immediately
    # overwrites `out` with the BN-folded quantized conv; that dead branch
    # (and the debug prints) do not affect the output and are skipped.
    out_flat, _, geom, _ = _conv_pallas(
        ("nhwc", x), qparams["conv1_w"], qparams["conv1_b"],
        stride=2, padding=3, relu=True)
    out = _extract_nhwc(out_flat, geom)

    out = maxpool_fq_3x3_s2_p1(out, width)

    for stage in qparams["layers"]:
        for blk in stage:
            out = basic_block(out, blk, width)

    return jnp.transpose(out, (0, 3, 1, 2))  # NHWC -> NCHW


if __name__ == "__main__":
    key = jax.random.PRNGKey(0)
    pkey, xkey = jax.random.split(key)
    params = init_params(pkey, layers=(1, 1, 1, 1))   # small ResNet config
    qparams = prepare_params(params)                  # fold + quantize once
    x = jax.random.normal(xkey, (2, 3, 32, 32), jnp.float32)  # NCHW input

    fwd = jax.jit(lambda inp: resnet_forward(inp, qparams))
    out = jax.block_until_ready(fwd(x))
    assert out.shape == (2, 512, 1, 1), out.shape
    print("KERNEL_OK")
</pallas_src>

<mosaic_0001>
module attributes {stable_mosaic.version = 11 : i64} {
  func.func @_absmax_kernel(%arg0: i32, %arg1: memref<24x512xf32, #tpu.memory_space<vmem>>, %arg2: memref<1x1xf32, #tpu.memory_space<vmem>>) attributes {dimension_semantics = [#tpu.dimension_semantics<arbitrary>], iteration_bounds = array<i64: 1>, scalar_prefetch = 0 : i64, scratch_operands = 0 : i64, tpu.core_type = #tpu.core_type<tc>, window_params = [{transform_indices = @transform_0, window_bounds = array<i64: 24, 512>}, {pipeline_mode = #tpu.pipeline_mode<synchronous>, transform_indices = @transform_1, window_bounds = array<i64: 1, 1>}]} {
    %c0_i32 = arith.constant 0 : i32
    %0 = arith.cmpi eq, %arg0, %c0_i32 : i32
    %1 = arith.extui %0 : i1 to i32
    %c0_i32_0 = arith.constant 0 : i32
    %2 = arith.cmpi ne, %1, %c0_i32_0 : i32
    scf.if %2 {
      %cst_6 = arith.constant 0.000000e+00 : f32
      %13 = vector.broadcast %cst_6 : f32 to vector<1x1xf32>
      %c0_7 = arith.constant 0 : index
      %c0_8 = arith.constant 0 : index
      %14 = vector.load %arg2[%c0_7, %c0_8] : memref<1x1xf32, #tpu.memory_space<vmem>>, vector<1x1xf32>
      tpu.vector_store %arg2[%c0_7, %c0_8], %13 {strides = array<i32>} : memref<1x1xf32, #tpu.memory_space<vmem>>, vector<1x1xf32>,
    } else {
    }
    %c0 = arith.constant 0 : index
    %c0_1 = arith.constant 0 : index
    %3 = vector.load %arg2[%c0, %c0_1] : memref<1x1xf32, #tpu.memory_space<vmem>>, vector<1x1xf32>
    %c0_2 = arith.constant 0 : index
    %c0_3 = arith.constant 0 : index
    %4 = vector.load %arg1[%c0_2, %c0_3] : memref<24x512xf32, #tpu.memory_space<vmem>>, vector<24x512xf32>
    %5 = math.absf %4 : vector<24x512xf32>
    %6 = vector.shape_cast %5 : vector<24x512xf32> to vector<1x24x512xf32>
    %cst = arith.constant dense<0xFF800000> : vector<1xf32>
    %7 = vector.multi_reduction <maximumf>, %6, %cst [1, 2] : vector<1x24x512xf32> to vector<1xf32>
    %8 = vector.shape_cast %7 : vector<1xf32> to vector<1x1x1xf32>
    %9 = vector.extract %8[0, 0, 0] : f32 from vector<1x1x1xf32>
    %10 = vector.broadcast %9 : f32 to vector<1x1xf32>
    %11 = arith.maximumf %3, %10 : vector<1x1xf32>
    %c0_4 = arith.constant 0 : index
    %c0_5 = arith.constant 0 : index
    %12 = vector.load %arg2[%c0_4, %c0_5] : memref<1x1xf32, #tpu.memory_space<vmem>>, vector<1x1xf32>
    tpu.vector_store %arg2[%c0_4, %c0_5], %11 {strides = array<i32>} : memref<1x1xf32, #tpu.memory_space<vmem>>, vector<1x1xf32>,
    return
  }
  func.func @transform_0(%arg0: i32) -> (i32, i32) {
    %c0_i32 = arith.constant 0 : i32
    %c0_i32_0 = arith.constant 0 : i32
    return %arg0, %c0_i32 : i32, i32
  }
  func.func @transform_1(%arg0: i32) -> (i32, i32) {
    %c0_i32 = arith.constant 0 : i32
    %c0_i32_0 = arith.constant 0 : i32
    %c0_i32_1 = arith.constant 0 : i32
    return %c0_i32, %c0_i32_0 : i32, i32
  }
}

</mosaic_0001>

<llo_original>
// kernel: tpu_custom_call.1
$region0: #{tpu_custom_call.1}
  #allocation0 [shape = 'u32[]', space=smem, size = 0x4, offset = 0x4, fixed_abs, tag = 'smem constant byte address 0x4 - core index']
  #allocation1 [shape = 'u32[144,128]{1,0:T(1,128)}', space=vmem, size = 0x12000, scoped, tag = 'internal scratch']
  %s0 = inlined_call_operand.hbm [shape: f32[24,512], index: 0, kind: input, shape index: {}]
  %s1 = inlined_call_operand.hbm [shape: f32[1,1], index: 1, kind: output, shape index: {}]
  %s2 = sld [smem:[#allocation0]]
  $region22: #{tpu_custom_call.1} parent=0
    _
  %s4 = ssub.s32 1, %s2
  %s5 = scalar_select 0, %s4, %s2
  $region1: #{tpu_custom_call.1} parent=0
    #allocation2 [shape = 'u8[49152]{0}', space=vmem, size = 0xc000, scoped, tag = 'input window, operand 0, single buffered']
    #allocation3 [shape = 's32[1]{0}', space=sflag, size = 0x4, scoped, tag = 'scoped memory for tpu_custom_call.1']
    #allocation4 [shape = 's32[1]{0}', space=sflag, size = 0x4, scoped, tag = 'scoped memory for tpu_custom_call.1']
    #allocation5 [shape = 'u8[512]{0}', space=vmem, size = 0x400, scoped, tag = 'output window, operand 0, single buffered']
    %6 = vsyncpa [#allocation3], 0
    %7 = vsyncpa [#allocation4], 0
    // Predicated region
    $region2: #{tpu_custom_call.1} parent=1 // pred_check
      _
    $region3: #{tpu_custom_call.1} parent=1 // pred_check_branch
      %9 = sbr.rel (0) target = $region5
    $region4: #{tpu_custom_call.1} parent=1 // pred_region
      %s11 = ssub.s32 1536, 1536
      %12 = vsyncadd [#allocation3], %s11
      %s13 = sshll.u32 [#allocation2], 4
      %s14 = int_to_ptr.vmem [resolvable:$true] %s13
      %19 = dma.hbm_to_vmem [thread:$0]  %s0, 1536, %s14, [#allocation3], 512, 512, 32
    $region5: #{tpu_custom_call.1} parent=1 // pred_fallthru
      _
    // Predicated region
    $region6: #{tpu_custom_call.1} parent=1 // pred_check
      _
    $region7: #{tpu_custom_call.1} parent=1 // pred_check_branch
      %21 = sbr.rel (0) target = $region9
    $region8: #{tpu_custom_call.1} parent=1 // pred_region
      %22 = dma.done [#allocation3], 1536
    $region9: #{tpu_custom_call.1} parent=1 // pred_fallthru
      _
    %p23 = scmp.eq.s32.totalorder 0, 0
    // Predicated region
    $region10: #{tpu_custom_call.1} parent=1 // pred_check
      %p24 = pneg %p23
    $region11: #{tpu_custom_call.1} parent=1 // pred_check_branch
      %26 = sbr.rel (%p24) target = $region13
    $region12: #{tpu_custom_call.1} parent=1 // pred_region
      %vm27 = vcmask 0
      %28 = vst.msk [vmem:[#allocation5] sm:$0x1] %vm27, 0.0
    $region13: #{tpu_custom_call.1} parent=1 // pred_fallthru
      _
    %v29 = vld [vmem:[#allocation5] sm:$0x1]
    %v30 = vld [vmem:[#allocation2] sm:$0xff]
    %v31 = vld [vmem:[#allocation2 + $0x8] sm:$0xff]
    %v32 = vld [vmem:[#allocation2 + $0x10] sm:$0xff]
    %v33 = vld [vmem:[#allocation2 + $0x18] sm:$0xff]
    %v34 = vld [vmem:[#allocation2 + $0x20] sm:$0xff]
    %v35 = vld [vmem:[#allocation2 + $0x28] sm:$0xff]
    %v36 = vld [vmem:[#allocation2 + $0x30] sm:$0xff]
    %v37 = vld [vmem:[#allocation2 + $0x38] sm:$0xff]
    %v38 = vld [vmem:[#allocation2 + $0x40] sm:$0xff]
    %v39 = vld [vmem:[#allocation2 + $0x48] sm:$0xff]
    %v40 = vld [vmem:[#allocation2 + $0x50] sm:$0xff]
    %v41 = vld [vmem:[#allocation2 + $0x58] sm:$0xff]
    %v42 = vand.u32 2147483647, %v30
    %v43 = vand.u32 2147483647, %v31
    %v44 = vand.u32 2147483647, %v32
    %v45 = vand.u32 2147483647, %v33
    %v46 = vand.u32 2147483647, %v34
    %v47 = vand.u32 2147483647, %v35
    %v48 = vand.u32 2147483647, %v36
    %v49 = vand.u32 2147483647, %v37
    %v50 = vand.u32 2147483647, %v38
    %v51 = vand.u32 2147483647, %v39
    %v52 = vand.u32 2147483647, %v40
    %v53 = vand.u32 2147483647, %v41
    %v54 = vmax.f32 %v42, %v46
    %v55 = vmax.f32 %v43, %v47
    %v56 = vmax.f32 %v44, %v48
    %v57 = vmax.f32 %v45, %v49
    %v58 = vmax.f32 %v54, %v50
    %v59 = vmax.f32 %v55, %v51
    %v60 = vmax.f32 %v56, %v52
    %v61 = vmax.f32 %v57, %v53
    %v62 = vmax.f32 %v58, %v59
    %v63 = vmax.f32 %v60, %v61
    %v64 = vmax.f32 %v62, %v63
    %65 = vmax.xlane.f32.xlu0 %v64
    %v66 = vpop.xlane.xlu0 %65
    %v67 = vrot.slane %v66, 4
    %v68 = vmax.f32 %v66, %v67
    %v69 = vrot.slane %v68, 2
    %v70 = vmax.f32 %v68, %v69
    %v71 = vrot.slane %v70, 1
    %v72 = vmax.f32 %v70, %v71
    %s73 = vtos %v72
    %v74 = vstv %s73
    %v75 = vmax.f32 %v29, %v74
    %vm76 = vcmask 0
    %77 = vst.msk [vmem:[#allocation5] sm:$0x1] %vm76, %v75
    // Predicated region
    $region14: #{tpu_custom_call.1} parent=1 // pred_check
      _
    $region15: #{tpu_custom_call.1} parent=1 // pred_check_branch
      %79 = sbr.rel (0) target = $region17
    $region16: #{tpu_custom_call.1} parent=1 // pred_region
      %s81 = ssub.s32 16, 16
      %82 = vsyncadd [#allocation4], %s81
      %s84 = sshll.u32 [#allocation5], 4
      %s85 = int_to_ptr.vmem [resolvable:$true] %s84
      %87 = dma.vmem_to_hbm [thread:$0]  %s85, 16, %s1, [#allocation4]
    $region17: #{tpu_custom_call.1} parent=1 // pred_fallthru
      _
    // Predicated region
    $region18: #{tpu_custom_call.1} parent=1 // pred_check
      _
    $region19: #{tpu_custom_call.1} parent=1 // pred_check_branch
      %89 = sbr.rel (0) target = $region21
    $region20: #{tpu_custom_call.1} parent=1 // pred_region
      %90 = dma.done [#allocation4], 16
    $region21: #{tpu_custom_call.1} parent=1 // pred_fallthru
      _
    %91 = vsyncpa [#allocation3], 1
    %92 = vsyncpa [#allocation4], 1

</llo_original>
